<compile_context>
chip_gen: v5e
topology: v5e:2x2
jax: 0.10.0
libtpu: 0.0.40
codegen_flags: <defaults>
</compile_context>

<pallas_src>
import jax
import jax.numpy as jnp
import numpy as np
from jax.experimental import pallas as pl

# ---- small, forward-consistent shapes -------------------------------------
B  = 2     # batch
L  = 8     # text sequence length
T  = 16    # number of video clips
DV = 32    # raw visual feature dim
H  = 32    # hidden dim
V  = 64    # vocab size
K  = 3     # frame_layer conv kernel size

BL = B * L            # 16 stacked text rows
BT = B * T            # 32 stacked video rows
VP = 80               # augmented/padded vocab rows: V tokens + [MASK] + pad

_SCALE = 1.0 / float(H) ** 0.5
_NT = (((1,), (1,)), ((), ()))      # "A @ B.T" contraction, no transpose op

# row offsets inside the packed (272, 32) weight array (all multiples of 16 so
# every slice is bf16-tile aligned -> clean loads, no sublane relayout)
_EMB0, _WT0, _WQ0, _WO0, _CONV0, _WCOL_ROWS = 0, 80, 112, 144, 176, 272

# output slab lane layout (rows = B*T):
#   lanes   0: 32  logits_visual rows, stacked (B*T, H)
#   lanes  32: 64  s @ e^T, full (B*T, B*T) (wrapper keeps the diagonal blocks)
#   lanes  64:128  logits_text, stacked (B*L, V) in rows 0:B*L (rest zero)


# ---------------------------------------------------------------------------
# Fused, batch-folded TAN kernel (single invocation, whole arrays in VMEM).
# ---------------------------------------------------------------------------
def _tan_kernel(txt_ref, abias_ref, xcat_ref, wcol_ref, wwide_ref, b_ref,
                out_ref):
    f32, bf16 = jnp.float32, jnp.bfloat16

    # ---- token embedding + [MASK] blend as ONE one-hot matmul ---------------
    ids = txt_ref[:, 0:1]                                   # (BL, 1) f32 (ints)
    wm  = txt_ref[:, 1:2]                                   # (BL, 1) f32
    col = jax.lax.broadcasted_iota(jnp.int32, (BL, VP), 1)
    onehot = (jnp.where(col.astype(f32) == ids, 1.0 - wm, 0.0)
              + jnp.where(col == V, wm, 0.0))               # (BL, VP)
    text_emb = jnp.dot(onehot.astype(bf16), wcol_ref[_EMB0:_WT0, :],
                       preferred_element_type=f32)          # (BL, H)

    # ---- text MLP ------------------------------------------------------------
    # TODO(synk): jax.nn.gelu defaults to the tanh approximation (PyTorch
    # nn.GELU default is exact erf); the external bert_layer is unspecified.
    text_h = jax.nn.gelu(
        jnp.dot(text_emb.astype(bf16), wcol_ref[_WT0:_WQ0, :],
                preferred_element_type=f32) + b_ref[0:1, 0:H])        # (BL, H)
    text_bf = text_h.astype(bf16)

    # ---- fused text heads: [k | v | logits_text] in one 128-lane matmul ------
    text_out = jnp.dot(text_bf, wwide_ref[:, 0:128],
                       preferred_element_type=f32) + b_ref[2:3, :]    # (BL,128)
    k_all  = text_out[:, 0:H].astype(bf16)                            # (BL, H)
    v_all  = text_out[:, H:2 * H].astype(bf16)                        # (BL, H)
    lt_all = text_out[:, 2 * H:128]                                   # (BL, V)

    # ---- frame_layer Conv1d(k=3): one (BT, 96) @ (96, H) matmul --------------
    vis_h = jnp.maximum(
        jnp.dot(xcat_ref[...], wcol_ref[_CONV0:_WCOL_ROWS, :],
                preferred_element_type=f32) + b_ref[1:2, 0:H], 0.0)   # (BT, H)
    vis_bf = vis_h.astype(bf16)

    # ---- visual -> text cross attention (block-diagonal over folded batch) ---
    q = jnp.dot(vis_bf, wcol_ref[_WQ0:_WO0, :], preferred_element_type=f32)
    scores = jax.lax.dot_general(q.astype(bf16), k_all, _NT,
                                 preferred_element_type=f32)          # (BT, BL)
    scores = scores * _SCALE + abias_ref[...]
    scores = scores - jnp.max(scores, axis=-1, keepdims=True)
    p = jnp.exp(scores)
    attn = p * pl.reciprocal(jnp.sum(p, axis=-1, keepdims=True), approx=False)
    ctx = jnp.dot(attn.astype(bf16), v_all, preferred_element_type=f32)
    fused = jax.nn.gelu(vis_h + jnp.dot(ctx.astype(bf16),
                                        wcol_ref[_WO0:_CONV0, :],
                                        preferred_element_type=f32))  # (BT, H)
    fused_bf = fused.astype(bf16)

    # ---- fused output heads: [s | e | logits_visual] in one 96-lane matmul ---
    heads = jnp.dot(fused_bf, wwide_ref[:, 128:224],
                    preferred_element_type=f32) + b_ref[3:4, 0:96]    # (BT, 96)
    s = heads[:, 0:H].astype(bf16)
    e = heads[:, H:2 * H].astype(bf16)
    lv_all = heads[:, 2 * H:96]                                       # (BT, H)
    iou_full = jax.lax.dot_general(s, e, _NT,
                                   preferred_element_type=f32)        # (BT, BT)

    # ---- lane-dense output slab: one full-width store, one dense writeback ---
    lt_block = jnp.concatenate([lt_all, jnp.zeros((BT - BL, V), f32)], axis=0)
    out_ref[...] = jnp.concatenate([lv_all, iou_full, lt_block], axis=1)


def _tan_pallas(txt_meta, attn_bias, x_cat, w_col, w_wide, biases):
    # No grid: a single invocation; whole (tiny) operands land in VMEM.
    return pl.pallas_call(
        _tan_kernel,
        out_shape=jax.ShapeDtypeStruct((BT, 128), jnp.float32),
    )(txt_meta, attn_bias, x_cat, w_col, w_wide, biases)


@jax.jit
def _forward_logits_jit(packed, textual_input, textual_mask, word_mask,
                        visual_input):
    f32 = jnp.float32

    # per-example operands (layout plumbing only — no compute hoisted)
    ids = textual_input.astype(f32).reshape(BL, 1)
    wm = word_mask.astype(f32).reshape(BL, 1)
    txt_meta = jnp.concatenate([ids, wm], axis=1)                    # (BL, 2)

    # block-diagonal (batch-fold) + padding mask -> additive bias
    row_b = jnp.arange(BT)[:, None] // T
    col_b = jnp.arange(BL)[None, :] // L
    valid = (row_b == col_b) & (textual_mask.astype(f32).reshape(1, BL) > 0.5)
    attn_bias = jnp.where(valid, 0.0, -1e9).astype(f32)              # (BT, BL)

    # frame-conv halo: lane-concat [x[t-1] | x[t] | x[t+1]] per batch element
    xp = jnp.pad(visual_input, ((0, 0), (1, 1), (0, 0)))             # (B,T+2,DV)
    x_cat = jnp.concatenate([xp[:, 0:T], xp[:, 1:T + 1], xp[:, 2:T + 2]],
                            axis=-1).reshape(BT, K * DV).astype(jnp.bfloat16)

    slab = _tan_pallas(txt_meta, attn_bias, x_cat,
                       packed["w_col"], packed["w_wide"], packed["biases"])

    # unpack the lane-dense slab (layout plumbing)
    lv = slab[:, 0:H].reshape(B, T, H).transpose(0, 2, 1)            # (B, H, T)
    iou_full = slab[:, H:2 * H]                                      # (BT, BT)
    liou = jnp.stack([iou_full[b * T:(b + 1) * T, b * T:(b + 1) * T]
                      for b in range(B)], axis=0)                    # (B, T, T)
    lt = slab[0:BL, 2 * H:128].reshape(B, L, V)                      # (B, L, V)
    return lt, lv, liou


# ---------------------------------------------------------------------------
# TAN wrapper (mirrors the PyTorch module's forward / forward_logits)
# ---------------------------------------------------------------------------
class TAN:
    def __init__(self, key):
        ks = jax.random.split(key, 16)
        s = 0.02
        bf16, f32 = jnp.bfloat16, jnp.float32

        def w(k, shape):   # weights stored bf16 (MXU inputs)
            return (jax.random.normal(k, shape) * s).astype(bf16)

        def b(k, shape):   # biases stay f32
            return (jax.random.normal(k, shape) * s).astype(f32)

        p = {
            "emb":      w(ks[0], (V, H)),
            "mask_emb": w(ks[1], (1, H)),
            "conv_w":   w(ks[2], (K, DV, H)),
            "conv_b":   b(ks[3], (H,)),
            "wt":   w(ks[4],  (H, H)), "bt":   b(ks[5],  (H,)),
            "wq":   w(ks[6],  (H, H)),
            "wk":   w(ks[7],  (H, H)),
            "wv":   w(ks[8],  (H, H)),
            "wo":   w(ks[9],  (H, H)),
            "wvoc": w(ks[10], (H, V)), "bvoc": b(ks[11], (V,)),
            "wvh":  w(ks[12], (H, H)), "bvh":  b(ks[13], (H,)),
            "ws":   w(ks[14], (H, H)),
            "we":   w(ks[15], (H, H)),
        }
        self.params = p

        # ---- packed kernel operands (built once, host-side) -----------------
        emb_aug = (jnp.zeros((VP, H), bf16)
                   .at[:V].set(p["emb"])
                   .at[V].set(p["mask_emb"][0]))            # rows V+1..VP-1 = 0
        w_col = jnp.concatenate(
            [emb_aug, p["wt"], p["wq"], p["wo"], p["conv_w"].reshape(K * DV, H)],
            axis=0).astype(bf16)                                     # (272, 32)
        w_wide = jnp.concatenate(
            [p["wk"], p["wv"], p["wvoc"], p["ws"], p["we"], p["wvh"]],
            axis=1).astype(bf16)                                     # (32, 224)
        biases = jnp.zeros((4, 128), f32)
        biases = biases.at[0, 0:H].set(p["bt"])
        biases = biases.at[1, 0:H].set(p["conv_b"])
        biases = biases.at[2, 2 * H:128].set(p["bvoc"])
        biases = biases.at[3, 2 * H:96].set(p["bvh"])
        self.packed = {"w_col": w_col, "w_wide": w_wide, "biases": biases}

        # parameter-free, shape-static: build once (hoisted out of forward)
        self.iou_mask_map = jnp.triu(jnp.ones((T, T), jnp.float32))

    def forward_logits(self, textual_input, textual_mask, word_mask,
                       visual_input):
        lt, lv, liou = _forward_logits_jit(self.packed, textual_input,
                                           textual_mask, word_mask,
                                           visual_input)
        # lv is already (B, H, T): the PyTorch `logits_visual.transpose(1, 2)`
        # is handled by the slab unpacking.
        return lt, lv, liou, self.iou_mask_map

    def forward(self, textual_input, textual_mask, visual_input,
                gt_maps=None, gt_times=None, word_label=None, word_mask=None,
                mode="train", **kwargs):
        if word_mask is None and word_label is None:
            word_label = jnp.ones(textual_mask.shape, dtype=jnp.int32)
            word_mask = jnp.zeros(textual_mask.shape, dtype=jnp.float32)
        else:
            word_mask = word_mask.astype(jnp.float32)
        logits = self.forward_logits(textual_input, textual_mask,
                                     word_mask, visual_input)
        # TODO(synk): bce_rescale_loss / nms are not part of the provided
        # module; return the logits tuple that feeds them instead of losses.
        return logits


# ---------------------------------------------------------------------------
# Pure-JAX reference (for correctness checking of the fused kernel)
# ---------------------------------------------------------------------------
def _reference(params, textual_input, textual_mask, word_mask, visual_input):
    f = lambda a: a.astype(jnp.float32)
    p = params
    text_emb = jnp.take(f(p["emb"]), textual_input, axis=0)             # (B,L,H)
    wm = word_mask[..., None]
    text_emb = text_emb * (1.0 - wm) + wm * f(p["mask_emb"])[None]
    text_h = jax.nn.gelu(text_emb @ f(p["wt"]) + p["bt"])

    w = f(p["conv_w"])
    xpad = jnp.pad(visual_input, ((0, 0), (1, 1), (0, 0)))
    acc = sum(jnp.einsum("btd,dh->bth", xpad[:, k:k + T], w[k]) for k in range(K))
    vis_h = jnp.maximum(acc + p["conv_b"], 0.0)                          # (B,T,H)

    q = vis_h @ f(p["wq"])
    kk = text_h @ f(p["wk"])
    vv = text_h @ f(p["wv"])
    scores = jnp.einsum("bth,blh->btl", q, kk) * _SCALE
    scores = scores + ((textual_mask - 1.0) * 1e9)[:, None, :]
    attn = jax.nn.softmax(scores, axis=-1)
    ctx = jnp.einsum("btl,blh->bth", attn, vv)
    fused = jax.nn.gelu(vis_h + ctx @ f(p["wo"]))

    lt = text_h @ f(p["wvoc"]) + p["bvoc"]                               # (B,L,V)
    lv = jnp.einsum("bth,ho->bot", fused, f(p["wvh"])) \
        + p["bvh"][None, :, None]                                        # (B,H,T)
    s = fused @ f(p["ws"])
    e = fused @ f(p["we"])
    liou = jnp.einsum("bth,bsh->bts", s, e)                              # (B,T,T)
    return lt, lv, liou


# ---------------------------------------------------------------------------
if __name__ == "__main__":
    key = jax.random.PRNGKey(0)
    k_tok, k_vis, k_param = jax.random.split(key, 3)

    model = TAN(k_param)

    textual_input = jax.random.randint(k_tok, (B, L), 0, V, dtype=jnp.int32)
    textual_mask = jnp.ones((B, L), jnp.float32).at[1, 6:].set(0.0)
    word_mask = jnp.zeros((B, L), jnp.float32).at[0, 2].set(1.0).at[1, 5].set(1.0)
    word_label = jnp.ones((B, L), jnp.int32)
    visual_input = jax.random.normal(k_vis, (B, T, DV), jnp.float32)
    gt_maps = jnp.zeros((B, T, T), jnp.float32)
    gt_times = jnp.zeros((B, 2), jnp.float32)

    out = model.forward(textual_input, textual_mask, visual_input,
                        gt_maps, gt_times, word_label=word_label,
                        word_mask=word_mask, mode="train")
    out = jax.block_until_ready(out)

    logits_text, logits_visual, logits_iou, iou_mask_map = out
    assert logits_text.shape == (B, L, V)
    assert logits_visual.shape == (B, H, T)
    assert logits_iou.shape == (B, T, T)
    assert iou_mask_map.shape == (T, T)

    # correctness check against a pure-JAX reference (bf16 MXU inputs -> loose atol)
    ref_lt, ref_lv, ref_liou = _reference(model.params, textual_input,
                                          textual_mask, word_mask, visual_input)
    np.testing.assert_allclose(np.asarray(logits_text),   np.asarray(ref_lt),
                               atol=1e-2, rtol=0)
    np.testing.assert_allclose(np.asarray(logits_visual), np.asarray(ref_lv),
                               atol=1e-2, rtol=0)
    np.testing.assert_allclose(np.asarray(logits_iou),    np.asarray(ref_liou),
                               atol=1e-2, rtol=0)

    print("KERNEL_OK")
</pallas_src>

<mosaic_0001>
module attributes {stable_mosaic.version = 11 : i64} {
  func.func @_tan_kernel(%arg0: memref<16x2xf32, #tpu.memory_space<vmem>>, %arg1: memref<32x16xf32, #tpu.memory_space<vmem>>, %arg2: memref<32x96xbf16, #tpu.memory_space<vmem>>, %arg3: memref<272x32xbf16, #tpu.memory_space<vmem>>, %arg4: memref<32x224xbf16, #tpu.memory_space<vmem>>, %arg5: memref<4x128xf32, #tpu.memory_space<vmem>>, %arg6: memref<32x128xf32, #tpu.memory_space<vmem>>) attributes {dimension_semantics = [], scalar_prefetch = 0 : i64, scratch_operands = 0 : i64, tpu.core_type = #tpu.core_type<tc>} {
    %c0 = arith.constant 0 : index
    %c0_0 = arith.constant 0 : index
    %0 = vector.load %arg0[%c0, %c0_0] : memref<16x2xf32, #tpu.memory_space<vmem>>, vector<16x1xf32>
    %c0_1 = arith.constant 0 : index
    %c1 = arith.constant 1 : index
    %1 = vector.load %arg0[%c0_1, %c1] : memref<16x2xf32, #tpu.memory_space<vmem>>, vector<16x1xf32>
    %2 = tpu.iota {dimensions = array<i32: 1>} : vector<16x80xi32>
    %3 = arith.sitofp %2 : vector<16x80xi32> to vector<16x80xf32>
    %4 = vector.broadcast %0 : vector<16x1xf32> to vector<16x80xf32>
    %5 = arith.cmpf oeq, %3, %4 : vector<16x80xf32>
    %cst = arith.constant 1.000000e+00 : f32
    %6 = vector.broadcast %cst : f32 to vector<16x1xf32>
    %7 = arith.subf %6, %1 : vector<16x1xf32>
    %cst_2 = arith.constant 0.000000e+00 : f32
    %8 = vector.shape_cast %7 : vector<16x1xf32> to vector<16x1xf32>
    %9 = vector.broadcast %8 : vector<16x1xf32> to vector<16x80xf32>
    %10 = vector.broadcast %cst_2 : f32 to vector<16x80xf32>
    %11 = arith.select %5, %9, %10 : vector<16x80xi1>, vector<16x80xf32>
    %c64_i32 = arith.constant 64 : i32
    %12 = vector.broadcast %c64_i32 : i32 to vector<16x80xi32>
    %13 = arith.cmpi eq, %2, %12 : vector<16x80xi32>
    %cst_3 = arith.constant 0.000000e+00 : f32
    %14 = vector.shape_cast %1 : vector<16x1xf32> to vector<16x1xf32>
    %15 = vector.broadcast %14 : vector<16x1xf32> to vector<16x80xf32>
    %16 = vector.broadcast %cst_3 : f32 to vector<16x80xf32>
    %17 = arith.select %13, %15, %16 : vector<16x80xi1>, vector<16x80xf32>
    %18 = arith.addf %11, %17 : vector<16x80xf32>
    %19 = arith.truncf %18 : vector<16x80xf32> to vector<16x80xbf16>
    %c0_4 = arith.constant 0 : index
    %c0_5 = arith.constant 0 : index
    %20 = vector.load %arg3[%c0_4, %c0_5] : memref<272x32xbf16, #tpu.memory_space<vmem>>, vector<80x32xbf16>
    %cst_6 = arith.constant dense<0.000000e+00> : vector<16x32xf32>
    %21 = tpu.matmul %19, %20, %cst_6 {dimension_numbers = #tpu.dot_dimension_numbers<[1], [0], [0], [1], [0, 0, 1, 1], [], []>} : vector<16x80xbf16>, vector<80x32xbf16>, vector<16x32xf32> -> vector<16x32xf32>
    %22 = arith.truncf %21 : vector<16x32xf32> to vector<16x32xbf16>
    %c80 = arith.constant 80 : index
    %c0_7 = arith.constant 0 : index
    %23 = vector.load %arg3[%c80, %c0_7] : memref<272x32xbf16, #tpu.memory_space<vmem>>, vector<32x32xbf16>
    %cst_8 = arith.constant dense<0.000000e+00> : vector<16x32xf32>
    %24 = tpu.matmul %22, %23, %cst_8 {dimension_numbers = #tpu.dot_dimension_numbers<[1], [0], [0], [1], [0, 0, 1, 1], [], []>} : vector<16x32xbf16>, vector<32x32xbf16>, vector<16x32xf32> -> vector<16x32xf32>
    %c0_9 = arith.constant 0 : index
    %c0_10 = arith.constant 0 : index
    %25 = vector.load %arg5[%c0_9, %c0_10] : memref<4x128xf32, #tpu.memory_space<vmem>>, vector<1x32xf32>
    %26 = vector.broadcast %25 : vector<1x32xf32> to vector<16x32xf32>
    %27 = arith.addf %24, %26 : vector<16x32xf32>
    %28 = arith.mulf %27, %27 : vector<16x32xf32>
    %29 = arith.mulf %27, %28 : vector<16x32xf32>
    %cst_11 = arith.constant 4.471500e-02 : f32
    %30 = vector.broadcast %cst_11 : f32 to vector<16x32xf32>
    %31 = arith.mulf %30, %29 : vector<16x32xf32>
    %32 = arith.addf %27, %31 : vector<16x32xf32>
    %cst_12 = arith.constant 0.797884583 : f32
    %33 = vector.broadcast %cst_12 : f32 to vector<16x32xf32>
    %34 = arith.mulf %33, %32 : vector<16x32xf32>
    %35 = math.tanh %34 : vector<16x32xf32>
    %cst_13 = arith.constant 1.000000e+00 : f32
    %36 = vector.broadcast %cst_13 : f32 to vector<16x32xf32>
    %37 = arith.addf %36, %35 : vector<16x32xf32>
    %cst_14 = arith.constant 5.000000e-01 : f32
    %38 = vector.broadcast %cst_14 : f32 to vector<16x32xf32>
    %39 = arith.mulf %38, %37 : vector<16x32xf32>
    %40 = arith.mulf %27, %39 : vector<16x32xf32>
    %41 = arith.truncf %40 : vector<16x32xf32> to vector<16x32xbf16>
    %c0_15 = arith.constant 0 : index
    %c0_16 = arith.constant 0 : index
    %42 = vector.load %arg4[%c0_15, %c0_16] : memref<32x224xbf16, #tpu.memory_space<vmem>>, vector<32x128xbf16>
    %cst_17 = arith.constant dense<0.000000e+00> : vector<16x128xf32>
    %43 = tpu.matmul %41, %42, %cst_17 {dimension_numbers = #tpu.dot_dimension_numbers<[1], [0], [0], [1], [0, 0, 1, 1], [], []>} : vector<16x32xbf16>, vector<32x128xbf16>, vector<16x128xf32> -> vector<16x128xf32>
    %c2 = arith.constant 2 : index
    %c0_18 = arith.constant 0 : index
    %44 = vector.load %arg5[%c2, %c0_18] : memref<4x128xf32, #tpu.memory_space<vmem>>, vector<1x128xf32>
    %45 = vector.broadcast %44 : vector<1x128xf32> to vector<16x128xf32>
    %46 = arith.addf %43, %45 : vector<16x128xf32>
    %47 = vector.extract_strided_slice %46 {offsets = [0, 0], sizes = [16, 32], strides = [1, 1]} : vector<16x128xf32> to vector<16x32xf32>
    %48 = arith.truncf %47 : vector<16x32xf32> to vector<16x32xbf16>
    %49 = vector.extract_strided_slice %46 {offsets = [0, 32], sizes = [16, 32], strides = [1, 1]} : vector<16x128xf32> to vector<16x32xf32>
    %50 = arith.truncf %49 : vector<16x32xf32> to vector<16x32xbf16>
    %51 = vector.extract_strided_slice %46 {offsets = [0, 64], sizes = [16, 64], strides = [1, 1]} : vector<16x128xf32> to vector<16x64xf32>
    %c0_19 = arith.constant 0 : index
    %c0_20 = arith.constant 0 : index
    %52 = vector.load %arg2[%c0_19, %c0_20] : memref<32x96xbf16, #tpu.memory_space<vmem>>, vector<32x96xbf16>
    %c176 = arith.constant 176 : index
    %c0_21 = arith.constant 0 : index
    %53 = vector.load %arg3[%c176, %c0_21] : memref<272x32xbf16, #tpu.memory_space<vmem>>, vector<96x32xbf16>
    %cst_22 = arith.constant dense<0.000000e+00> : vector<32x32xf32>
    %54 = tpu.matmul %52, %53, %cst_22 {dimension_numbers = #tpu.dot_dimension_numbers<[1], [0], [0], [1], [0, 0, 1, 1], [], []>} : vector<32x96xbf16>, vector<96x32xbf16>, vector<32x32xf32> -> vector<32x32xf32>
    %c1_23 = arith.constant 1 : index
    %c0_24 = arith.constant 0 : index
    %55 = vector.load %arg5[%c1_23, %c0_24] : memref<4x128xf32, #tpu.memory_space<vmem>>, vector<1x32xf32>
    %56 = vector.broadcast %55 : vector<1x32xf32> to vector<32x32xf32>
    %57 = arith.addf %54, %56 : vector<32x32xf32>
    %cst_25 = arith.constant 0.000000e+00 : f32
    %58 = vector.broadcast %cst_25 : f32 to vector<32x32xf32>
    %59 = arith.maximumf %57, %58 : vector<32x32xf32>
    %60 = arith.truncf %59 : vector<32x32xf32> to vector<32x32xbf16>
    %c112 = arith.constant 112 : index
    %c0_26 = arith.constant 0 : index
    %61 = vector.load %arg3[%c112, %c0_26] : memref<272x32xbf16, #tpu.memory_space<vmem>>, vector<32x32xbf16>
    %cst_27 = arith.constant dense<0.000000e+00> : vector<32x32xf32>
    %62 = tpu.matmul %60, %61, %cst_27 {dimension_numbers = #tpu.dot_dimension_numbers<[1], [0], [0], [1], [0, 0, 1, 1], [], []>} : vector<32x32xbf16>, vector<32x32xbf16>, vector<32x32xf32> -> vector<32x32xf32>
    %63 = arith.truncf %62 : vector<32x32xf32> to vector<32x32xbf16>
    %cst_28 = arith.constant dense<0.000000e+00> : vector<32x16xf32>
    %64 = tpu.matmul %63, %48, %cst_28 {dimension_numbers = #tpu.dot_dimension_numbers<[1], [1], [0], [0], [0, 0, 1, 0], [], []>} : vector<32x32xbf16>, vector<16x32xbf16>, vector<32x16xf32> -> vector<32x16xf32>
    %cst_29 = arith.constant 0.176776692 : f32
    %65 = vector.broadcast %cst_29 : f32 to vector<32x16xf32>
    %66 = arith.mulf %64, %65 : vector<32x16xf32>
    %c0_30 = arith.constant 0 : index
    %c0_31 = arith.constant 0 : index
    %67 = vector.load %arg1[%c0_30, %c0_31] : memref<32x16xf32, #tpu.memory_space<vmem>>, vector<32x16xf32>
    %68 = arith.addf %66, %67 : vector<32x16xf32>
    %cst_32 = arith.constant dense<0xFF800000> : vector<32xf32>
    %69 = vector.multi_reduction <maximumf>, %68, %cst_32 [1] : vector<32x16xf32> to vector<32xf32>
    %70 = vector.shape_cast %69 : vector<32xf32> to vector<32x1xf32>
    %71 = vector.broadcast %70 : vector<32x1xf32> to vector<32x16xf32>
    %72 = arith.subf %68, %71 : vector<32x16xf32>
    %73 = math.exp %72 : vector<32x16xf32>
    %cst_33 = arith.constant dense<0.000000e+00> : vector<32xf32>
    %74 = vector.multi_reduction <add>, %73, %cst_33 [1] : vector<32x16xf32> to vector<32xf32>
    %75 = vector.shape_cast %74 : vector<32xf32> to vector<32x1xf32>
    %76 = tpu.reciprocal %75 : vector<32x1xf32> -> vector<32x1xf32>
    %77 = vector.broadcast %76 : vector<32x1xf32> to vector<32x16xf32>
    %78 = arith.mulf %73, %77 : vector<32x16xf32>
    %79 = arith.truncf %78 : vector<32x16xf32> to vector<32x16xbf16>
    %cst_34 = arith.constant dense<0.000000e+00> : vector<32x32xf32>
    %80 = tpu.matmul %79, %50, %cst_34 {dimension_numbers = #tpu.dot_dimension_numbers<[1], [0], [0], [1], [0, 0, 1, 1], [], []>} : vector<32x16xbf16>, vector<16x32xbf16>, vector<32x32xf32> -> vector<32x32xf32>
    %81 = arith.truncf %80 : vector<32x32xf32> to vector<32x32xbf16>
    %c144 = arith.constant 144 : index
    %c0_35 = arith.constant 0 : index
    %82 = vector.load %arg3[%c144, %c0_35] : memref<272x32xbf16, #tpu.memory_space<vmem>>, vector<32x32xbf16>
    %cst_36 = arith.constant dense<0.000000e+00> : vector<32x32xf32>
    %83 = tpu.matmul %81, %82, %cst_36 {dimension_numbers = #tpu.dot_dimension_numbers<[1], [0], [0], [1], [0, 0, 1, 1], [], []>} : vector<32x32xbf16>, vector<32x32xbf16>, vector<32x32xf32> -> vector<32x32xf32>
    %84 = arith.addf %59, %83 : vector<32x32xf32>
    %85 = arith.mulf %84, %84 : vector<32x32xf32>
    %86 = arith.mulf %84, %85 : vector<32x32xf32>
    %cst_37 = arith.constant 4.471500e-02 : f32
    %87 = vector.broadcast %cst_37 : f32 to vector<32x32xf32>
    %88 = arith.mulf %87, %86 : vector<32x32xf32>
    %89 = arith.addf %84, %88 : vector<32x32xf32>
    %cst_38 = arith.constant 0.797884583 : f32
    %90 = vector.broadcast %cst_38 : f32 to vector<32x32xf32>
    %91 = arith.mulf %90, %89 : vector<32x32xf32>
    %92 = math.tanh %91 : vector<32x32xf32>
    %cst_39 = arith.constant 1.000000e+00 : f32
    %93 = vector.broadcast %cst_39 : f32 to vector<32x32xf32>
    %94 = arith.addf %93, %92 : vector<32x32xf32>
    %cst_40 = arith.constant 5.000000e-01 : f32
    %95 = vector.broadcast %cst_40 : f32 to vector<32x32xf32>
    %96 = arith.mulf %95, %94 : vector<32x32xf32>
    %97 = arith.mulf %84, %96 : vector<32x32xf32>
    %98 = arith.truncf %97 : vector<32x32xf32> to vector<32x32xbf16>
    %c0_41 = arith.constant 0 : index
    %c128 = arith.constant 128 : index
    %99 = vector.load %arg4[%c0_41, %c128] : memref<32x224xbf16, #tpu.memory_space<vmem>>, vector<32x96xbf16>
    %cst_42 = arith.constant dense<0.000000e+00> : vector<32x96xf32>
    %100 = tpu.matmul %98, %99, %cst_42 {dimension_numbers = #tpu.dot_dimension_numbers<[1], [0], [0], [1], [0, 0, 1, 1], [], []>} : vector<32x32xbf16>, vector<32x96xbf16>, vector<32x96xf32> -> vector<32x96xf32>
    %c3 = arith.constant 3 : index
    %c0_43 = arith.constant 0 : index
    %101 = vector.load %arg5[%c3, %c0_43] : memref<4x128xf32, #tpu.memory_space<vmem>>, vector<1x96xf32>
    %102 = vector.broadcast %101 : vector<1x96xf32> to vector<32x96xf32>
    %103 = arith.addf %100, %102 : vector<32x96xf32>
    %104 = vector.extract_strided_slice %103 {offsets = [0, 0], sizes = [32, 32], strides = [1, 1]} : vector<32x96xf32> to vector<32x32xf32>
    %105 = arith.truncf %104 : vector<32x32xf32> to vector<32x32xbf16>
    %106 = vector.extract_strided_slice %103 {offsets = [0, 32], sizes = [32, 32], strides = [1, 1]} : vector<32x96xf32> to vector<32x32xf32>
    %107 = arith.truncf %106 : vector<32x32xf32> to vector<32x32xbf16>
    %108 = vector.extract_strided_slice %103 {offsets = [0, 64], sizes = [32, 32], strides = [1, 1]} : vector<32x96xf32> to vector<32x32xf32>
    %cst_44 = arith.constant dense<0.000000e+00> : vector<32x32xf32>
    %109 = tpu.matmul %105, %107, %cst_44 {dimension_numbers = #tpu.dot_dimension_numbers<[1], [1], [0], [0], [0, 0, 1, 0], [], []>} : vector<32x32xbf16>, vector<32x32xbf16>, vector<32x32xf32> -> vector<32x32xf32>
    %cst_45 = arith.constant 0.000000e+00 : f32
    %110 = vector.broadcast %cst_45 : f32 to vector<16x64xf32>
    %111 = tpu.concatenate %51, %110 in 0 : vector<16x64xf32>, vector<16x64xf32> -> vector<32x64xf32>
    %112 = tpu.concatenate %108, %109, %111 in 1 : vector<32x32xf32>, vector<32x32xf32>, vector<32x64xf32> -> vector<32x128xf32>
    %c0_46 = arith.constant 0 : index
    %c0_47 = arith.constant 0 : index
    %113 = vector.load %arg6[%c0_46, %c0_47] : memref<32x128xf32, #tpu.memory_space<vmem>>, vector<32x128xf32>
    tpu.vector_store %arg6[%c0_46, %c0_47], %112 {strides = array<i32>} : memref<32x128xf32, #tpu.memory_space<vmem>>, vector<32x128xf32>,
    return
  }
}

</mosaic_0001>

<llo_original>
// kernel: _forward_logits_jit.1
$region0: #{_forward_logits_jit.1}
  #allocation0 [shape = 'u32[]', space=smem, size = 0x4, offset = 0x4, fixed_abs, tag = 'smem constant byte address 0x4 - core index']
  #allocation1 [shape = 'u32[72,128]{1,0:T(1,128)}', space=vmem, size = 0x9000, scoped, tag = 'internal scratch']
  %s0 = inlined_call_operand.vmem [shape: f32[16,2], index: 0, kind: input, shape index: {}]
  %s1 = inlined_call_operand.vmem [shape: f32[32,16], index: 1, kind: input, shape index: {}]
  %s2 = inlined_call_operand.vmem [shape: bf16[32,96], index: 2, kind: input, shape index: {}]
  %s3 = inlined_call_operand.vmem [shape: bf16[272,32], index: 3, kind: input, shape index: {}]
  %s4 = inlined_call_operand.vmem [shape: bf16[32,224], index: 4, kind: input, shape index: {}]
  %s5 = inlined_call_operand.vmem [shape: f32[4,128], index: 5, kind: input, shape index: {}]
  %s6 = inlined_call_operand.vmem [shape: f32[32,128], index: 6, kind: output, shape index: {}]
  %s7 = sld [smem:[#allocation0]]
  $region34: #{_forward_logits_jit.1} parent=0
    _
  %s9 = ssub.s32 1, %s7
  %s10 = scalar_select 0, %s9, %s7
  // Predicated region
  $region2: #{_forward_logits_jit.1} parent=0 // pred_check
    _
  $region3: #{_forward_logits_jit.1} parent=0 // pred_check_branch
    %12 = sbr.rel (0) target = $region5
  $region4: #{_forward_logits_jit.1} parent=0 // pred_region
    _
  $region5: #{_forward_logits_jit.1} parent=0 // pred_fallthru
    _
  // Predicated region
  $region6: #{_forward_logits_jit.1} parent=0 // pred_check
    _
  $region7: #{_forward_logits_jit.1} parent=0 // pred_check_branch
    %14 = sbr.rel (0) target = $region9
  $region8: #{_forward_logits_jit.1} parent=0 // pred_region
    _
  $region9: #{_forward_logits_jit.1} parent=0 // pred_fallthru
    _
  // Predicated region
  $region10: #{_forward_logits_jit.1} parent=0 // pred_check
    _
  $region11: #{_forward_logits_jit.1} parent=0 // pred_check_branch
    %16 = sbr.rel (0) target = $region13
  $region12: #{_forward_logits_jit.1} parent=0 // pred_region
    _
  $region13: #{_forward_logits_jit.1} parent=0 // pred_fallthru
    _
  // Predicated region
  $region14: #{_forward_logits_jit.1} parent=0 // pred_check
    _
  $region15: #{_forward_logits_jit.1} parent=0 // pred_check_branch
    %18 = sbr.rel (0) target = $region17
  $region16: #{_forward_logits_jit.1} parent=0 // pred_region
    _
  $region17: #{_forward_logits_jit.1} parent=0 // pred_fallthru
    _
  // Predicated region
  $region18: #{_forward_logits_jit.1} parent=0 // pred_check
    _
  $region19: #{_forward_logits_jit.1} parent=0 // pred_check_branch
    %20 = sbr.rel (0) target = $region21
  $region20: #{_forward_logits_jit.1} parent=0 // pred_region
    _
  $region21: #{_forward_logits_jit.1} parent=0 // pred_fallthru
    _
  // Predicated region
  $region22: #{_forward_logits_jit.1} parent=0 // pred_check
    _
  $region23: #{_forward_logits_jit.1} parent=0 // pred_check_branch
    %22 = sbr.rel (0) target = $region25
  $region24: #{_forward_logits_jit.1} parent=0 // pred_region
    _
  $region25: #{_forward_logits_jit.1} parent=0 // pred_fallthru
    _
  %v24 = vld [vmem:[%s0] sm:$0xff]
  %v25 = vld [vmem:[%s0 + $0x8] sm:$0xff]
  %v26 = vlaneseq
  %v27 = vand.u32 %v26, 127
  %v28 = vcvt.s32.f32 %v27
  %30 = vset.pattern.permute.xlu0 0
  %31 = vperm.xlu0 %30, %v24
  %v32 = vpop.permute.xlu0 %31
  %35 = vset.pattern.permute.xlu0 0
  %36 = vperm.xlu0 %35, %v25
  %v37 = vpop.permute.xlu0 %36
  %vm39 = vcmp.eq.f32.partialorder %v28, %v32
  %vm40 = vcmp.eq.f32.partialorder %v28, %v37
  %v41 = vsub.f32 1.0, %v24
  %v42 = vsub.f32 1.0, %v25
  %44 = vset.pattern.permute.xlu0 1
  %45 = vperm.xlu0 %44, %v41
  %v46 = vpop.permute.xlu0 %45
  %49 = vset.pattern.permute.xlu0 1
  %50 = vperm.xlu0 %49, %v42
  %v51 = vpop.permute.xlu0 %50
  %v53 = vsel %vm39, %v46, 0.0
  %v54 = vsel %vm40, %v51, 0.0
  %vm55 = vcmp.eq.s32.totalorder %v27, 64
  %56 = vset.pattern.permute.xlu0 1
  %57 = vperm.xlu0 %56, %v24
  %v58 = vpop.permute.xlu0 %57
  %60 = vset.pattern.permute.xlu0 1
  %61 = vperm.xlu0 %60, %v25
  %v62 = vpop.permute.xlu0 %61
  %v64 = vsel %vm55, %v58, 0.0
  %v65 = vsel %vm55, %v62, 0.0
  %v66 = vadd.f32 %v53, %v64
  %v67 = vadd.f32 %v54, %v65
  %v68 = vpack.c.bf16 %v67, %v66
  %v69 = vld [vmem:[%s3] sm:$0xf]
  %v70 = vld [vmem:[%s3 + $0x4] sm:$0xf]
  %v71 = vld [vmem:[%s3 + $0x8] sm:$0xf]
  %v72 = vld [vmem:[%s3 + $0xc] sm:$0xf]
  %v73 = vld [vmem:[%s3 + $0x10] sm:$0xf]
  %v74 = vld [vmem:[%s3 + $0x14] sm:$0xf]
  %v75 = vld [vmem:[%s3 + $0x18] sm:$0xf]
  %v76 = vld [vmem:[%s3 + $0x1c] sm:$0xf]
  %v77 = vld [vmem:[%s3 + $0x20] sm:$0xf]
  %v78 = vld [vmem:[%s3 + $0x24] sm:$0xf]
  %v89 = vunpack.c.l.b16 %v69
  %v90 = vunpack.c.l.b16 %v70
  %v91 = vunpack.c.l.b16 %v71
  %v92 = vunpack.c.l.b16 %v72
  %v93 = vunpack.c.l.b16 %v73
  %v94 = vunpack.c.l.b16 %v74
  %v95 = vunpack.c.l.b16 %v75
  %v96 = vunpack.c.l.b16 %v76
  %v97 = vunpack.c.l.b16 %v77
  %v98 = vunpack.c.l.b16 %v78
  %v99 = vpack.c.b16 %v90, %v89
  %v100 = vpack.c.b16 %v92, %v91
  %v101 = vpack.c.b16 %v94, %v93
  %v102 = vpack.c.b16 %v96, %v95
  %v103 = vpack.c.b16 %v98, %v97
  %vm109 = vcmask 654336
  %v111 = vsel %vm109, %v68, 0
  %113 = vmatpush.bf16.msra.mxu0 0
  %114 = vmatpush.bf16.msra.mxu0 0
  %115 = vmatpush.bf16.msra.mxu0 0
  %116 = vmatpush.bf16.msra.mxu0 %v103
  %117 = vmatpush.bf16.msra.mxu0 %v102
  %118 = vmatpush.bf16.msra.mxu0 %v101
  %119 = vmatpush.bf16.msra.mxu0 %v100
  %120 = vmatpush.bf16.msra.mxu0 %v99
  %121 = vmatmul.bf16.gmra.mxu0 %v111
  %v122 = vpop.f32.mrf.mxu0
  %v123 = vadd.f32 0.0, %v122
  %v124 = vpop.f32.mrf.mxu0
  %v125 = vadd.f32 0.0, %v124
  %126 = vdwg.mxu0
  %v127 = vpack.c.bf16 %v125, %v123
  %v128 = vld [vmem:[%s3 + $0x28] sm:$0xf]
  %v129 = vld [vmem:[%s3 + $0x2c] sm:$0xf]
  %v130 = vld [vmem:[%s3 + $0x30] sm:$0xf]
  %v131 = vld [vmem:[%s3 + $0x34] sm:$0xf]
  %v132 = vld [vmem:[%s5] sm:$0x1]
  %v133 = vperm.slane %v132, 0
  %v138 = vunpack.c.l.b16 %v128
  %v139 = vunpack.c.l.b16 %v129
  %v140 = vunpack.c.l.b16 %v130
  %v141 = vunpack.c.l.b16 %v131
  %v142 = vpack.c.b16 %v139, %v138
  %v143 = vpack.c.b16 %v141, %v140
  %vm146 = vcmask 261120
  %v148 = vsel %vm146, %v127, 0
  %150 = vmatpush.bf16.msra.mxu0 0
  %151 = vmatpush.bf16.msra.mxu0 0
  %152 = vmatpush.bf16.msra.mxu0 0
  %153 = vmatpush.bf16.msra.mxu0 0
  %154 = vmatpush.bf16.msra.mxu0 0
  %155 = vmatpush.bf16.msra.mxu0 0
  %156 = vmatpush.bf16.msra.mxu0 %v143
  %157 = vmatpush.bf16.msra.mxu0 %v142
  %158 = vmatmul.bf16.gmra.mxu0 %v148
  %v159 = vpop.f32.mrf.mxu0
  %v160 = vadd.f32 %v133, %v159
  %v161 = vpop.f32.mrf.mxu0
  %v162 = vadd.f32 %v133, %v161
  %163 = vdwg.mxu0
  %v164 = vmul.f32 %v160, %v160
  %v165 = vmul.f32 %v162, %v162
  %v166 = vmul.f32 %v160, %v164
  %v167 = vmul.f32 %v162, %v165
  %v168 = vmul.f32 %v166, 0.044715
  %v169 = vmul.f32 %v167, 0.044715
  %v170 = vadd.f32 %v160, %v168
  %v171 = vadd.f32 %v162, %v169
  %v172 = vmul.f32 %v170, 0.7978846
  %v173 = vmul.f32 %v171, 0.7978846
  %v174 = vtanh.pop %v172
  %v175 = vtanh.pop %v173
  %v176 = vadd.f32 %v174, 1.0
  %v177 = vadd.f32 %v175, 1.0
  %v178 = vmul.f32 %v176, 0.5
  %v179 = vmul.f32 %v177, 0.5
  %v180 = vmul.f32 %v160, %v178
  %v181 = vmul.f32 %v162, %v179
  %v182 = vpack.c.bf16 %v181, %v180
  %v183 = vld [vmem:[%s4] sm:$0xf]
  %v184 = vld [vmem:[%s4 + $0x8] sm:$0xf]
  %v185 = vld [vmem:[%s4 + $0x10] sm:$0xf]
  %v186 = vld [vmem:[%s4 + $0x18] sm:$0xf]
  %v187 = vld [vmem:[%s5 + $0x2] sm:$0x1]
  %v188 = vperm.slane %v187, 0
  %v193 = vunpack.c.l.b16 %v183
  %v194 = vunpack.c.l.b16 %v184
  %v195 = vunpack.c.l.b16 %v185
  %v196 = vunpack.c.l.b16 %v186
  %v197 = vpack.c.b16 %v194, %v193
  %v198 = vpack.c.b16 %v196, %v195
  %v202 = vsel %vm146, %v182, 0
  %204 = vmatpush.bf16.msra.mxu0 0
  %205 = vmatpush.bf16.msra.mxu0 0
  %206 = vmatpush.bf16.msra.mxu0 0
  %207 = vmatpush.bf16.msra.mxu0 0
  %208 = vmatpush.bf16.msra.mxu0 0
  %209 = vmatpush.bf16.msra.mxu0 0
  %210 = vmatpush.bf16.msra.mxu0 %v198
  %211 = vmatpush.bf16.msra.mxu0 %v197
  %212 = vmatmul.bf16.gmra.mxu0 %v202
  %v213 = vpop.f32.mrf.mxu0
  %v214 = vadd.f32 %v188, %v213
  %v215 = vpop.f32.mrf.mxu0
  %v216 = vadd.f32 %v188, %v215
  %217 = vdwg.mxu0
  %v218 = vpack.c.bf16 %v216, %v214
  %v219 = vld [vmem:[%s2] sm:$0xf]
  %v220 = vld [vmem:[%s2 + $0x4] sm:$0xf]
  %v221 = vld [vmem:[%s2 + $0x8] sm:$0xf]
  %v222 = vld [vmem:[%s2 + $0xc] sm:$0xf]
  %v223 = vld [vmem:[%s3 + $0x58] sm:$0xf]
  %v224 = vld [vmem:[%s3 + $0x5c] sm:$0xf]
  %v225 = vld [vmem:[%s3 + $0x60] sm:$0xf]
  %v226 = vld [vmem:[%s3 + $0x64] sm:$0xf]
  %v227 = vld [vmem:[%s3 + $0x68] sm:$0xf]
  %v228 = vld [vmem:[%s3 + $0x6c] sm:$0xf]
  %v229 = vld [vmem:[%s3 + $0x70] sm:$0xf]
  %v230 = vld [vmem:[%s3 + $0x74] sm:$0xf]
  %v231 = vld [vmem:[%s3 + $0x78] sm:$0xf]
  %v232 = vld [vmem:[%s3 + $0x7c] sm:$0xf]
  %v233 = vld [vmem:[%s3 + $0x80] sm:$0xf]
  %v234 = vld [vmem:[%s3 + $0x84] sm:$0xf]
  %v235 = vld [vmem:[%s5 + $0x1] sm:$0x1]
  %v236 = vperm.slane %v235, 0
  %v241 = vunpack.c.l.b16 %v219
  %v242 = vunpack.c.l.b16 %v220
  %v243 = vunpack.c.l.b16 %v221
  %v244 = vunpack.c.l.b16 %v222
  %v245 = vpack.c.b16 %v242, %v241
  %v246 = vpack.c.b16 %v244, %v243
  %v259 = vunpack.c.l.b16 %v223
  %v260 = vunpack.c.l.b16 %v224
  %v261 = vunpack.c.l.b16 %v225
  %v262 = vunpack.c.l.b16 %v226
  %v263 = vunpack.c.l.b16 %v227
  %v264 = vunpack.c.l.b16 %v228
  %v265 = vunpack.c.l.b16 %v229
  %v266 = vunpack.c.l.b16 %v230
  %v267 = vunpack.c.l.b16 %v231
  %v268 = vunpack.c.l.b16 %v232
  %v269 = vunpack.c.l.b16 %v233
  %v270 = vunpack.c.l.b16 %v234
  %v271 = vpack.c.b16 %v260, %v259
  %v272 = vpack.c.b16 %v262, %v261
  %v273 = vpack.c.b16 %v264, %v263
  %v274 = vpack.c.b16 %v266, %v265
  %v275 = vpack.c.b16 %v268, %v267
  %v276 = vpack.c.b16 %v270, %v269
  %vm283 = vcmask 785408
  %v285 = vsel %vm283, %v245, 0
  %v288 = vsel %vm283, %v246, 0
  %290 = vmatpush.bf16.msra.mxu0 0
  %291 = vmatpush.bf16.msra.mxu0 0
  %292 = vmatpush.bf16.msra.mxu0 %v276
  %293 = vmatpush.bf16.msra.mxu0 %v275
  %294 = vmatpush.bf16.msra.mxu0 %v274
  %295 = vmatpush.bf16.msra.mxu0 %v273
  %296 = vmatpush.bf16.msra.mxu0 %v272
  %297 = vmatpush.bf16.msra.mxu0 %v271
  %298 = vmatmul.bf16.gmra.mxu0 %v285
  %v299 = vpop.f32.mrf.mxu0
  %v300 = vadd.f32 %v236, %v299
  %v301 = vpop.f32.mrf.mxu0
  %v302 = vadd.f32 %v236, %v301
  %303 = vmatmul.bf16.gmra.mxu0 %v288
  %v304 = vpop.f32.mrf.mxu0
  %v305 = vadd.f32 %v236, %v304
  %v306 = vpop.f32.mrf.mxu0
  %v307 = vadd.f32 %v236, %v306
  %308 = vdwg.mxu0
  %v309 = vmax.f32 %v300, 0.0
  %v310 = vmax.f32 %v302, 0.0
  %v311 = vmax.f32 %v305, 0.0
  %v312 = vmax.f32 %v307, 0.0
  %v313 = vpack.c.bf16 %v310, %v309
  %v314 = vpack.c.bf16 %v312, %v311
  %v315 = vld [vmem:[%s3 + $0x38] sm:$0xf]
  %v316 = vld [vmem:[%s3 + $0x3c] sm:$0xf]
  %v317 = vld [vmem:[%s3 + $0x40] sm:$0xf]
  %v318 = vld [vmem:[%s3 + $0x44] sm:$0xf]
  %v323 = vunpack.c.l.b16 %v315
  %v324 = vunpack.c.l.b16 %v316
  %v325 = vunpack.c.l.b16 %v317
  %v326 = vunpack.c.l.b16 %v318
  %v327 = vpack.c.b16 %v324, %v323
  %v328 = vpack.c.b16 %v326, %v325
  %v332 = vsel %vm146, %v313, 0
  %v335 = vsel %vm146, %v314, 0
  %337 = vmatpush.bf16.msra.mxu0 0
  %338 = vmatpush.bf16.msra.mxu0 0
  %339 = vmatpush.bf16.msra.mxu0 0
  %340 = vmatpush.bf16.msra.mxu0 0
  %341 = vmatpush.bf16.msra.mxu0 0
  %342 = vmatpush.bf16.msra.mxu0 0
  %343 = vmatpush.bf16.msra.mxu0 %v328
  %344 = vmatpush.bf16.msra.mxu0 %v327
  %345 = vmatmul.bf16.gmra.mxu0 %v332
  %v346 = vpop.f32.mrf.mxu0
  %v347 = vadd.f32 0.0, %v346
  %v348 = vpop.f32.mrf.mxu0
  %v349 = vadd.f32 0.0, %v348
  %350 = vmatmul.bf16.gmra.mxu0 %v335
  %v351 = vpop.f32.mrf.mxu0
  %v352 = vadd.f32 0.0, %v351
  %v353 = vpop.f32.mrf.mxu0
  %v354 = vadd.f32 0.0, %v353
  %355 = vdwg.mxu0
  %v356 = vpack.c.bf16 %v349, %v347
  %v357 = vpack.c.bf16 %v354, %v352
  %v359 = vsel %vm146, %v356, 0
  %v362 = vsel %vm146, %v357, 0
  %v365 = vsel %vm146, %v218, 0
  %367 = vmatpush.bf16.xpose.msra.mxu0 0
  %368 = vmatpush.bf16.xpose.msra.mxu0 0
  %369 = vmatpush.bf16.xpose.msra.mxu0 0
  %370 = vmatpush.bf16.xpose.msra.mxu0 0
  %371 = vmatpush.bf16.xpose.msra.mxu0 0
  %372 = vmatpush.bf16.xpose.msra.mxu0 0
  %373 = vmatpush.bf16.xpose.msra.mxu0 0
  %374 = vmatpush.bf16.xpose.msra.mxu0 %v365
  %375 = vmatmul.bf16.gmra.mxu0 %v359
  %v376 = vpop.f32.mrf.mxu0
  %v377 = vadd.f32 0.0, %v376
  %v378 = vpop.f32.mrf.mxu0
  %v379 = vadd.f32 0.0, %v378
  %380 = vmatmul.bf16.gmra.mxu0 %v362
  %v381 = vpop.f32.mrf.mxu0
  %v382 = vadd.f32 0.0, %v381
  %v383 = vpop.f32.mrf.mxu0
  %v384 = vadd.f32 0.0, %v383
  %385 = vdwg.mxu0
  %v386 = vmul.f32 %v377, 0.17677669
  %v387 = vmul.f32 %v379, 0.17677669
  %v388 = vmul.f32 %v382, 0.17677669
  %v389 = vmul.f32 %v384, 0.17677669
  %v390 = vld [vmem:[%s1] sm:$0xff]
  %v391 = vld [vmem:[%s1 + $0x8] sm:$0xff]
  %v392 = vld [vmem:[%s1 + $0x10] sm:$0xff]
  %v393 = vld [vmem:[%s1 + $0x18] sm:$0xff]
  %v394 = vadd.f32 %v386, %v390
  %v395 = vadd.f32 %v387, %v391
  %v396 = vadd.f32 %v388, %v392
  %v397 = vadd.f32 %v389, %v393
  %vm398 = vcmask 130048
  %v399 = vsel %vm398, %v394, -inf
  %400 = vmax.xlane.f32.xlu0 %v399
  %v401 = vpop.xlane.xlu0 %400
  %v402 = vsel %vm398, %v395, -inf
  %403 = vmax.xlane.f32.xlu0 %v402
  %v404 = vpop.xlane.xlu0 %403
  %v405 = vsel %vm398, %v396, -inf
  %406 = vmax.xlane.f32.xlu0 %v405
  %v407 = vpop.xlane.xlu0 %406
  %v408 = vsel %vm398, %v397, -inf
  %409 = vmax.xlane.f32.xlu0 %v408
  %v410 = vpop.xlane.xlu0 %409
  %v411 = vsub.f32 %v394, %v401
  %v412 = vsub.f32 %v395, %v404
  %v413 = vsub.f32 %v396, %v407
  %v414 = vsub.f32 %v397, %v410
  %v415 = vmul.f32 %v411, 1.442695
  %v416 = vpow.pop %v415
  %v417 = vmul.f32 %v412, 1.442695
  %v418 = vpow.pop %v417
  %v419 = vmul.f32 %v413, 1.442695
  %v420 = vpow.pop %v419
  %v421 = vmul.f32 %v414, 1.442695
  %v422 = vpow.pop %v421
  %v423 = vsel %vm398, %v416, 0.0
  %424 = vadd.xlane.f32.xlu0 %v423
  %v425 = vpop.xlane.xlu0 %424
  %v426 = vsel %vm398, %v418, 0.0
  %427 = vadd.xlane.f32.xlu0 %v426
  %v428 = vpop.xlane.xlu0 %427
  %v429 = vsel %vm398, %v420, 0.0
  %430 = vadd.xlane.f32.xlu0 %v429
  %v431 = vpop.xlane.xlu0 %430
  %v432 = vsel %vm398, %v422, 0.0
  %433 = vadd.xlane.f32.xlu0 %v432
  %v434 = vpop.xlane.xlu0 %433
  %v435 = vrcp.pop %v425
  %v436 = vmul.f32 %v425, %v435
  %v437 = vsub.f32 1.0, %v436
  %v438 = vmul.f32 %v435, %v437
  %v439 = vadd.f32 %v435, %v438
  %vm440 = vweird.f32 %v425
  %vm441 = vweird.f32 %v435
  %vm442 = vmor %vm440, %vm441
  %v443 = vsel %vm442, %v435, %v439
  %v444 = vand.u32 2147483647, %v425
  %vm445 = vcmp.eq.f32.partialorder %v444, 8.507059e+37
  %v446 = vand.u32 %v425, 2147483648
  %v447 = vor.u32 1.1754944e-38, %v446
  %v448 = vsel %vm445, %v447, %v443
  %v449 = vrcp.pop %v428
  %v450 = vmul.f32 %v428, %v449
  %v451 = vsub.f32 1.0, %v450
  %v452 = vmul.f32 %v449, %v451
  %v453 = vadd.f32 %v449, %v452
  %vm454 = vweird.f32 %v428
  %vm455 = vweird.f32 %v449
  %vm456 = vmor %vm454, %vm455
  %v457 = vsel %vm456, %v449, %v453
  %v458 = vand.u32 2147483647, %v428
  %vm459 = vcmp.eq.f32.partialorder %v458, 8.507059e+37
  %v460 = vand.u32 %v428, 2147483648
  %v461 = vor.u32 1.1754944e-38, %v460
  %v462 = vsel %vm459, %v461, %v457
  %v463 = vrcp.pop %v431
  %v464 = vmul.f32 %v431, %v463
  %v465 = vsub.f32 1.0, %v464
  %v466 = vmul.f32 %v463, %v465
  %v467 = vadd.f32 %v463, %v466
  %vm468 = vweird.f32 %v431
  %vm469 = vweird.f32 %v463
  %vm470 = vmor %vm468, %vm469
  %v471 = vsel %vm470, %v463, %v467
  %v472 = vand.u32 2147483647, %v431
  %vm473 = vcmp.eq.f32.partialorder %v472, 8.507059e+37
  %v474 = vand.u32 %v431, 2147483648
  %v475 = vor.u32 1.1754944e-38, %v474
  %v476 = vsel %vm473, %v475, %v471
  %v477 = vrcp.pop %v434
  %v478 = vmul.f32 %v434, %v477
  %v479 = vsub.f32 1.0, %v478
  %v480 = vmul.f32 %v477, %v479
  %v481 = vadd.f32 %v477, %v480
  %vm482 = vweird.f32 %v434
  %vm483 = vweird.f32 %v477
  %vm484 = vmor %vm482, %vm483
  %v485 = vsel %vm484, %v477, %v481
  %v486 = vand.u32 2147483647, %v434
  %vm487 = vcmp.eq.f32.partialorder %v486, 8.507059e+37
  %v488 = vand.u32 %v434, 2147483648
  %v489 = vor.u32 1.1754944e-38, %v488
  %v490 = vsel %vm487, %v489, %v485
  %v491 = vmul.f32 %v416, %v448
  %v492 = vmul.f32 %v418, %v462
  %v493 = vmul.f32 %v420, %v476
  %v494 = vmul.f32 %v422, %v490
  %v495 = vpack.c.bf16 %v492, %v491
  %v496 = vpack.c.bf16 %v494, %v493
  %498 = vrot.lane.b32.xlu0 %v218, 96
  %v499 = vpop.permute.xlu0 %498
  %v502 = vsel %vm398, %v495, 0
  %v505 = vsel %vm398, %v496, 0
  %507 = vmatpush.bf16.msra.mxu0 0
  %508 = vmatpush.bf16.msra.mxu0 0
  %509 = vmatpush.bf16.msra.mxu0 0
  %510 = vmatpush.bf16.msra.mxu0 0
  %511 = vmatpush.bf16.msra.mxu0 0
  %512 = vmatpush.bf16.msra.mxu0 0
  %513 = vmatpush.bf16.msra.mxu0 0
  %514 = vmatpush.bf16.msra.mxu0 %v499
  %515 = vmatmul.bf16.gmra.mxu0 %v502
  %v516 = vpop.f32.mrf.mxu0
  %v517 = vadd.f32 0.0, %v516
  %v518 = vpop.f32.mrf.mxu0
  %v519 = vadd.f32 0.0, %v518
  %520 = vmatmul.bf16.gmra.mxu0 %v505
  %v521 = vpop.f32.mrf.mxu0
  %v522 = vadd.f32 0.0, %v521
  %v523 = vpop.f32.mrf.mxu0
  %v524 = vadd.f32 0.0, %v523
  %525 = vdwg.mxu0
  %v526 = vpack.c.bf16 %v519, %v517
  %v527 = vpack.c.bf16 %v524, %v522
  %v528 = vld [vmem:[%s3 + $0x48] sm:$0xf]
  %v529 = vld [vmem:[%s3 + $0x4c] sm:$0xf]
  %v530 = vld [vmem:[%s3 + $0x50] sm:$0xf]
  %v531 = vld [vmem:[%s3 + $0x54] sm:$0xf]
  %v536 = vunpack.c.l.b16 %v528
  %v537 = vunpack.c.l.b16 %v529
  %v538 = vunpack.c.l.b16 %v530
  %v539 = vunpack.c.l.b16 %v531
  %v540 = vpack.c.b16 %v537, %v536
  %v541 = vpack.c.b16 %v539, %v538
  %v545 = vsel %vm146, %v526, 0
  %v548 = vsel %vm146, %v527, 0
  %550 = vmatpush.bf16.msra.mxu0 0
  %551 = vmatpush.bf16.msra.mxu0 0
  %552 = vmatpush.bf16.msra.mxu0 0
  %553 = vmatpush.bf16.msra.mxu0 0
  %554 = vmatpush.bf16.msra.mxu0 0
  %555 = vmatpush.bf16.msra.mxu0 0
  %556 = vmatpush.bf16.msra.mxu0 %v541
  %557 = vmatpush.bf16.msra.mxu0 %v540
  %558 = vmatmul.bf16.gmra.mxu0 %v545
  %v559 = vpop.f32.mrf.mxu0
  %v560 = vadd.f32 0.0, %v559
  %v561 = vpop.f32.mrf.mxu0
  %v562 = vadd.f32 0.0, %v561
  %563 = vmatmul.bf16.gmra.mxu0 %v548
  %v564 = vpop.f32.mrf.mxu0
  %v565 = vadd.f32 0.0, %v564
  %v566 = vpop.f32.mrf.mxu0
  %v567 = vadd.f32 0.0, %v566
  %568 = vdwg.mxu0
  %v569 = vadd.f32 %v309, %v560
  %v570 = vadd.f32 %v310, %v562
  %v571 = vadd.f32 %v311, %v565
  %v572 = vadd.f32 %v312, %v567
  %v573 = vmul.f32 %v569, %v569
  %v574 = vmul.f32 %v570, %v570
  %v575 = vmul.f32 %v571, %v571
  %v576 = vmul.f32 %v572, %v572
  %v577 = vmul.f32 %v569, %v573
  %v578 = vmul.f32 %v570, %v574
  %v579 = vmul.f32 %v571, %v575
  %v580 = vmul.f32 %v572, %v576
  %v581 = vmul.f32 %v577, 0.044715
  %v582 = vmul.f32 %v578, 0.044715
  %v583 = vmul.f32 %v579, 0.044715
  %v584 = vmul.f32 %v580, 0.044715
  %v585 = vadd.f32 %v569, %v581
  %v586 = vadd.f32 %v570, %v582
  %v587 = vadd.f32 %v571, %v583
  %v588 = vadd.f32 %v572, %v584
  %v589 = vmul.f32 %v585, 0.7978846
  %v590 = vmul.f32 %v586, 0.7978846
  %v591 = vmul.f32 %v587, 0.7978846
  %v592 = vmul.f32 %v588, 0.7978846
  %v593 = vtanh.pop %v589
  %v594 = vtanh.pop %v590
  %v595 = vtanh.pop %v591
  %v596 = vtanh.pop %v592
  %v597 = vadd.f32 %v593, 1.0
  %v598 = vadd.f32 %v594, 1.0
  %v599 = vadd.f32 %v595, 1.0
  %v600 = vadd.f32 %v596, 1.0
  %v601 = vmul.f32 %v597, 0.5
  %v602 = vmul.f32 %v598, 0.5
  %v603 = vmul.f32 %v599, 0.5
  %v604 = vmul.f32 %v600, 0.5
  %v605 = vmul.f32 %v569, %v601
  %v606 = vmul.f32 %v570, %v602
  %v607 = vmul.f32 %v571, %v603
  %v608 = vmul.f32 %v572, %v604
  %v609 = vpack.c.bf16 %v606, %v605
  %v610 = vpack.c.bf16 %v608, %v607
  %v611 = vld [vmem:[%s4 + $0x4] sm:$0xf]
  %v612 = vld [vmem:[%s4 + $0xc] sm:$0xf]
  %v613 = vld [vmem:[%s4 + $0x14] sm:$0xf]
  %v614 = vld [vmem:[%s4 + $0x1c] sm:$0xf]
  %v615 = vld [vmem:[%s5 + $0x3] sm:$0x1]
  %v616 = vperm.slane %v615, 0
  %v621 = vunpack.c.l.b16 %v611
  %v622 = vunpack.c.l.b16 %v612
  %v623 = vunpack.c.l.b16 %v613
  %v624 = vunpack.c.l.b16 %v614
  %v625 = vpack.c.b16 %v622, %v621
  %v626 = vpack.c.b16 %v624, %v623
  %v630 = vsel %vm146, %v609, 0
  %v633 = vsel %vm146, %v610, 0
  %635 = vmatpush.bf16.msra.mxu0 0
  %636 = vmatpush.bf16.msra.mxu0 0
  %637 = vmatpush.bf16.msra.mxu0 0
  %638 = vmatpush.bf16.msra.mxu0 0
  %639 = vmatpush.bf16.msra.mxu0 0
  %640 = vmatpush.bf16.msra.mxu0 0
  %641 = vmatpush.bf16.msra.mxu0 %v626
  %642 = vmatpush.bf16.msra.mxu0 %v625
  %643 = vmatmul.bf16.gmra.mxu0 %v630
  %v644 = vpop.f32.mrf.mxu0
  %v645 = vadd.f32 %v616, %v644
  %v646 = vpop.f32.mrf.mxu0
  %v647 = vadd.f32 %v616, %v646
  %648 = vmatmul.bf16.gmra.mxu0 %v633
  %v649 = vpop.f32.mrf.mxu0
  %v650 = vadd.f32 %v616, %v649
  %v651 = vpop.f32.mrf.mxu0
  %v652 = vadd.f32 %v616, %v651
  %653 = vdwg.mxu0
  %v654 = vpack.c.bf16 %v647, %v645
  %v655 = vpack.c.bf16 %v652, %v650
  %658 = vrot.lane.b32.xlu0 %v654, 96
  %v659 = vpop.permute.xlu0 %658
  %660 = vrot.lane.b32.xlu0 %v655, 96
  %v661 = vpop.permute.xlu0 %660
  %v663 = vsel %vm146, %v654, 0
  %v666 = vsel %vm146, %v655, 0
  %v669 = vsel %vm146, %v659, 0
  %v672 = vsel %vm146, %v661, 0
  %674 = vmatpush.bf16.xpose.msra.mxu0 0
  %675 = vmatpush.bf16.xpose.msra.mxu0 0
  %676 = vmatpush.bf16.xpose.msra.mxu0 0
  %677 = vmatpush.bf16.xpose.msra.mxu0 0
  %678 = vmatpush.bf16.xpose.msra.mxu0 0
  %679 = vmatpush.bf16.xpose.msra.mxu0 0
  %680 = vmatpush.bf16.xpose.msra.mxu0 %v672
  %681 = vmatpush.bf16.xpose.msra.mxu0 %v669
  %682 = vmatmul.bf16.gmra.mxu0 %v663
  %v683 = vpop.f32.mrf.mxu0
  %v684 = vadd.f32 0.0, %v683
  %v685 = vpop.f32.mrf.mxu0
  %v686 = vadd.f32 0.0, %v685
  %687 = vmatmul.bf16.gmra.mxu0 %v666
  %v688 = vpop.f32.mrf.mxu0
  %v689 = vadd.f32 0.0, %v688
  %v690 = vpop.f32.mrf.mxu0
  %v691 = vadd.f32 0.0, %v690
  %692 = vdwg.mxu0
  %697 = vrot.lane.b32.xlu0 %v645, 64
  %v698 = vpop.permute.xlu0 %697
  %699 = vrot.lane.b32.xlu0 %v647, 64
  %v700 = vpop.permute.xlu0 %699
  %701 = vrot.lane.b32.xlu0 %v650, 64
  %v702 = vpop.permute.xlu0 %701
  %703 = vrot.lane.b32.xlu0 %v652, 64
  %v704 = vpop.permute.xlu0 %703
  %713 = vrot.lane.b32.xlu0 %v684, 32
  %v714 = vpop.permute.xlu0 %713
  %715 = vrot.lane.b32.xlu0 %v686, 32
  %v716 = vpop.permute.xlu0 %715
  %717 = vrot.lane.b32.xlu0 %v689, 32
  %v718 = vpop.permute.xlu0 %717
  %719 = vrot.lane.b32.xlu0 %v691, 32
  %v720 = vpop.permute.xlu0 %719
  %v725 = vsel %vm146, %v698, %v714
  %v726 = vsel %vm146, %v700, %v716
  %v727 = vsel %vm146, %v702, %v718
  %v728 = vsel %vm146, %v704, %v720
  %vm729 = vcmask 523264
  %v730 = vsel %vm729, %v725, %v214
  %v731 = vsel %vm729, %v726, %v216
  %v732 = vsel %vm729, %v727, 0.0
  %v733 = vsel %vm729, %v728, 0.0
  %734 = vst [vmem:[%s6] sm:$0xff] %v730
  %735 = vst [vmem:[%s6 + $0x8] sm:$0xff] %v731
  %736 = vst [vmem:[%s6 + $0x10] sm:$0xff] %v732
  %737 = vst [vmem:[%s6 + $0x18] sm:$0xff] %v733
  // Predicated region
  $region26: #{_forward_logits_jit.1} parent=0 // pred_check
    _
  $region27: #{_forward_logits_jit.1} parent=0 // pred_check_branch
    %739 = sbr.rel (0) target = $region29
  $region28: #{_forward_logits_jit.1} parent=0 // pred_region
    _
  $region29: #{_forward_logits_jit.1} parent=0 // pred_fallthru
    _
  // Predicated region
  $region30: #{_forward_logits_jit.1} parent=0 // pred_check
    _
  $region31: #{_forward_logits_jit.1} parent=0 // pred_check_branch
    %741 = sbr.rel (0) target = $region33
  $region32: #{_forward_logits_jit.1} parent=0 // pred_region
    _
  $region33: #{_forward_logits_jit.1} parent=0 // pred_fallthru
    _

</llo_original>
